<compile_context>
chip_gen: v7x
topology: tpu7x:2x2x1
jax: 0.10.0
libtpu: 0.0.40
codegen_flags: <defaults>
</compile_context>

<pallas_src>
import functools
import math

import jax
import jax.numpy as jnp
from jax.experimental import pallas as pl
from jax.experimental.pallas import tpu as pltpu


_SQRT_2_OVER_PI = math.sqrt(2.0 / math.pi)
_GELU_C1 = 0.044715 * _SQRT_2_OVER_PI


def _gelu_f32(x):
    # tanh-approximation GELU, fused polynomial form (~7 VALU + 1 EUP / element):
    #   0.5*x*(1 + tanh(c0*x + c1*x^3)) == hx + hx*tanh(x*(c0 + c1*x*x))
    t = jnp.tanh(x * (_SQRT_2_OVER_PI + _GELU_C1 * (x * x)))
    hx = 0.5 * x
    return hx + hx * t


def _predictor_kernel(x_ref, w1_ref, b1_ref, w2_ref, b2_ref, o_ref, *, pack, d):
    """Fused hot path: (MultiFuser pointwise mix + GELU) -> Linear -> GELU.

    `pack` consecutive logical rows are packed along lanes so the output tile is
    a lane-dense (tm//pack, pack*E) slab (pack*E == 128 when E divides 128).

    x_ref : (TMp, pack*D)        packed input rows, bf16
    w1_ref: (D, D)               MultiFuser mixing weight (stand-in Conv1d k=1), bf16
    b1_ref: (1, D)               f32
    w2_ref: (pack*D, pack*E)     block-diagonal final Linear weight, bf16
    b2_ref: (1, pack*E)          f32 (b2 tiled `pack` times)
    o_ref : (TMp, pack*E)
    """
    w1 = w1_ref[...]
    b1 = b1_ref[...]

    acc = None
    for g in range(pack):  # static, fully unrolled (pack <= 4)
        # 128-aligned lane slice of the packed input -> logical rows pack*r + g.
        xg = x_ref[:, g * d:(g + 1) * d]                      # (TMp, D) bf16
        hg = jnp.dot(xg, w1, preferred_element_type=jnp.float32)
        hg = _gelu_f32(hg + b1)                               # MultiFuser stand-in, f32 VPU math
        # Dropout(0.1) -> identity in eval mode.
        # Block-diagonal second matmul places this group's E outputs at lane
        # offset g*E without any masked store or in-kernel relayout.
        part = jnp.dot(hg.astype(w2_ref.dtype),
                       w2_ref[g * d:(g + 1) * d, :],
                       preferred_element_type=jnp.float32)    # (TMp, pack*E) f32
        acc = part if acc is None else acc + part

    y = _gelu_f32(acc + b2_ref[...])
    o_ref[...] = y.astype(o_ref.dtype)


def _round_up(x, m):
    return ((x + m - 1) // m) * m


def _block_diag(m, pack):
    if pack == 1:
        return m
    d, e = m.shape
    out = jnp.zeros((pack * d, pack * e), m.dtype)
    for g in range(pack):
        out = out.at[g * d:(g + 1) * d, g * e:(g + 1) * e].set(m)
    return out


@functools.partial(jax.jit, static_argnames=("tile_m",))
def predictor_forward(x, w1, b1, w2, b2, *, tile_m=512):
    """x: (B, C, L, D) with D = embed * number_of_features. Returns (B, C, L, embed)."""
    B, C, L, D = x.shape
    E = w2.shape[1]
    N = B * C * L
    out_dtype = x.dtype
    compute_dtype = jnp.bfloat16  # MXU operands; f32 accumulation inside the kernel

    # Lane packing factor: fold `pack` consecutive output rows into one 128-lane
    # row so the final store is unmasked (E=32 -> pack=4). Requires D % 128 == 0
    # for 128-aligned lane slices of the packed input.
    if E < 128 and 128 % E == 0 and D % 128 == 0:
        pack = 128 // E
    else:
        pack = 1  # TODO(synk): fallback keeps masked (sub-128-lane) output stores

    # Big row tiles (per-grid-step overhead ~0.35us, fills the MXU M dim), but keep
    # >= ~8 grid steps when N allows so the parallel 1-D grid can shard across both
    # v7x TensorCores.  16*pack keeps >= 16 sublanes per packed bf16 block.
    row_align = 16 * pack
    tile_cap = _round_up(pl.cdiv(N, 8), row_align)
    tm = max(row_align, min(_round_up(tile_m, row_align), tile_cap))
    n_pad = _round_up(N, tm)
    tm_p = tm // pack

    # Operand prep (wrapper/XLA side): bf16 matmul operands; block-diagonal second
    # weight so the kernel emits a lane-dense output slab.  Callers should pass x
    # already in bf16 to avoid an extra HBM cast pass.
    xq = x.astype(compute_dtype).reshape(N, D)
    if n_pad != N:
        xq = jnp.pad(xq, ((0, n_pad - N), (0, 0)))
    x_packed = xq.reshape(n_pad // pack, pack * D)            # pure contiguous reshape

    w1q = w1.astype(compute_dtype)
    w2_blk = _block_diag(w2, pack).astype(compute_dtype)      # (pack*D, pack*E)
    b1_2d = b1.astype(jnp.float32).reshape(1, D)
    b2_2d = jnp.tile(b2.astype(jnp.float32), pack).reshape(1, pack * E)

    # NOTE: weights use constant index maps (DMA'd once, kept resident). If D grows
    # large, consider pipeline_mode=pl.Buffered(1) on the weight specs and an
    # explicit vmem_limit_bytes (relevant under v7x's 64 MiB VMEM).
    out_packed = pl.pallas_call(
        functools.partial(_predictor_kernel, pack=pack, d=D),
        out_shape=jax.ShapeDtypeStruct((n_pad // pack, pack * E), out_dtype),
        grid_spec=pltpu.PrefetchScalarGridSpec(
            num_scalar_prefetch=0,
            grid=(n_pad // tm,),
            in_specs=[
                pl.BlockSpec((tm_p, pack * D), lambda i: (i, 0)),
                pl.BlockSpec((D, D), lambda i: (0, 0)),
                pl.BlockSpec((1, D), lambda i: (0, 0)),
                pl.BlockSpec((pack * D, pack * E), lambda i: (0, 0)),
                pl.BlockSpec((1, pack * E), lambda i: (0, 0)),
            ],
            out_specs=pl.BlockSpec((tm_p, pack * E), lambda i: (i, 0)),
        ),
        compiler_params=pltpu.CompilerParams(
            dimension_semantics=("parallel",),
        ),
    )(x_packed, w1q, b1_2d, w2_blk, b2_2d)

    out2d = out_packed.reshape(n_pad, E)[:N]                  # pure contiguous reshape + slice
    return out2d.reshape(B, C, L, E)


def _reference_forward(x, w1, b1, w2, b2):
    """Plain-JAX reference of the same math / same mixed precision, for sanity."""
    B, C, L, D = x.shape
    cd = jnp.bfloat16
    xb = x.reshape(-1, D).astype(cd)
    h = jnp.dot(xb, w1.astype(cd), preferred_element_type=jnp.float32)
    h = _gelu_f32(h + b1.astype(jnp.float32)[None, :])
    y = jnp.dot(h.astype(cd), w2.astype(cd), preferred_element_type=jnp.float32)
    y = _gelu_f32(y + b2.astype(jnp.float32)[None, :])
    return y.reshape(B, C, L, -1).astype(x.dtype)


if __name__ == "__main__":
    # Small, module-consistent shapes:
    #   embed = 32, number_of_features = 4  ->  D = embed * nf = 128
    #   x: (B=2, C=4, L=16, D=128)          ->  N = B*C*L = 128 rows
    embed = 32
    number_of_features = 4
    D = embed * number_of_features
    B, C, L = 2, 4, 16

    key = jax.random.PRNGKey(0)
    kx, kw1, kb1, kw2, kb2 = jax.random.split(key, 5)

    # Activations in bf16 (pass bf16 to avoid an extra HBM cast pass); params f32.
    x = jax.random.normal(kx, (B, C, L, D), dtype=jnp.float32).astype(jnp.bfloat16)

    w1 = jax.random.uniform(kw1, (D, D), jnp.float32, -1.0, 1.0) / math.sqrt(D)
    b1 = jax.random.uniform(kb1, (D,), jnp.float32, -1.0, 1.0) / math.sqrt(D)
    w2 = jax.random.uniform(kw2, (D, embed), jnp.float32, -1.0, 1.0) / math.sqrt(D)
    b2 = jax.random.uniform(kb2, (embed,), jnp.float32, -1.0, 1.0) / math.sqrt(D)

    out = predictor_forward(x, w1, b1, w2, b2)
    out = jax.block_until_ready(out)

    ref = _reference_forward(x, w1, b1, w2, b2)
    assert out.shape == (B, C, L, embed), out.shape
    assert jnp.allclose(out.astype(jnp.float32), ref.astype(jnp.float32),
                        atol=2e-2, rtol=2e-2), "mismatch vs reference"

    print("KERNEL_OK")
</pallas_src>

<mosaic_0001>
module attributes {stable_mosaic.version = 11 : i64} {
  func.func @_predictor_kernel(%arg0: i32, %arg1: memref<16x512xbf16, #tpu.memory_space<vmem>>, %arg2: memref<128x128xbf16, #tpu.memory_space<vmem>>, %arg3: memref<1x128xf32, #tpu.memory_space<vmem>>, %arg4: memref<512x128xbf16, #tpu.memory_space<vmem>>, %arg5: memref<1x128xf32, #tpu.memory_space<vmem>>, %arg6: memref<16x128xbf16, #tpu.memory_space<vmem>>) attributes {dimension_semantics = [#tpu.dimension_semantics<parallel>], iteration_bounds = array<i64: 2>, scalar_prefetch = 0 : i64, scratch_operands = 0 : i64, tpu.core_type = #tpu.core_type<tc>, window_params = [{transform_indices = @transform_0, window_bounds = array<i64: 16, 512>}, {pipeline_mode = #tpu.pipeline_mode<synchronous>, transform_indices = @transform_1, window_bounds = array<i64: 128, 128>}, {pipeline_mode = #tpu.pipeline_mode<synchronous>, transform_indices = @transform_2, window_bounds = array<i64: 1, 128>}, {pipeline_mode = #tpu.pipeline_mode<synchronous>, transform_indices = @transform_3, window_bounds = array<i64: 512, 128>}, {pipeline_mode = #tpu.pipeline_mode<synchronous>, transform_indices = @transform_4, window_bounds = array<i64: 1, 128>}, {transform_indices = @transform_5, window_bounds = array<i64: 16, 128>}]} {
    %c0 = arith.constant 0 : index
    %c0_0 = arith.constant 0 : index
    %0 = vector.load %arg2[%c0, %c0_0] : memref<128x128xbf16, #tpu.memory_space<vmem>>, vector<128x128xbf16>
    %c0_1 = arith.constant 0 : index
    %c0_2 = arith.constant 0 : index
    %1 = vector.load %arg3[%c0_1, %c0_2] : memref<1x128xf32, #tpu.memory_space<vmem>>, vector<1x128xf32>
    %c0_3 = arith.constant 0 : index
    %c0_4 = arith.constant 0 : index
    %2 = vector.load %arg1[%c0_3, %c0_4] : memref<16x512xbf16, #tpu.memory_space<vmem>>, vector<16x128xbf16>
    %cst = arith.constant dense<0.000000e+00> : vector<16x128xf32>
    %3 = tpu.matmul %2, %0, %cst {dimension_numbers = #tpu.dot_dimension_numbers<[1], [0], [0], [1], [0, 0, 1, 1], [], []>} : vector<16x128xbf16>, vector<128x128xbf16>, vector<16x128xf32> -> vector<16x128xf32>
    %4 = vector.broadcast %1 : vector<1x128xf32> to vector<16x128xf32>
    %5 = arith.addf %3, %4 : vector<16x128xf32>
    %6 = arith.mulf %5, %5 : vector<16x128xf32>
    %cst_5 = arith.constant 0.0356774069 : f32
    %7 = vector.broadcast %cst_5 : f32 to vector<16x128xf32>
    %8 = arith.mulf %7, %6 : vector<16x128xf32>
    %cst_6 = arith.constant 0.797884583 : f32
    %9 = vector.broadcast %cst_6 : f32 to vector<16x128xf32>
    %10 = arith.addf %9, %8 : vector<16x128xf32>
    %11 = arith.mulf %5, %10 : vector<16x128xf32>
    %12 = math.tanh %11 : vector<16x128xf32>
    %cst_7 = arith.constant 5.000000e-01 : f32
    %13 = vector.broadcast %cst_7 : f32 to vector<16x128xf32>
    %14 = arith.mulf %13, %5 : vector<16x128xf32>
    %15 = arith.mulf %14, %12 : vector<16x128xf32>
    %16 = arith.addf %14, %15 : vector<16x128xf32>
    %17 = arith.truncf %16 : vector<16x128xf32> to vector<16x128xbf16>
    %c0_8 = arith.constant 0 : index
    %c0_9 = arith.constant 0 : index
    %18 = vector.load %arg4[%c0_8, %c0_9] : memref<512x128xbf16, #tpu.memory_space<vmem>>, vector<128x128xbf16>
    %cst_10 = arith.constant dense<0.000000e+00> : vector<16x128xf32>
    %19 = tpu.matmul %17, %18, %cst_10 {dimension_numbers = #tpu.dot_dimension_numbers<[1], [0], [0], [1], [0, 0, 1, 1], [], []>} : vector<16x128xbf16>, vector<128x128xbf16>, vector<16x128xf32> -> vector<16x128xf32>
    %c0_11 = arith.constant 0 : index
    %c128 = arith.constant 128 : index
    %20 = vector.load %arg1[%c0_11, %c128] : memref<16x512xbf16, #tpu.memory_space<vmem>>, vector<16x128xbf16>
    %cst_12 = arith.constant dense<0.000000e+00> : vector<16x128xf32>
    %21 = tpu.matmul %20, %0, %cst_12 {dimension_numbers = #tpu.dot_dimension_numbers<[1], [0], [0], [1], [0, 0, 1, 1], [], []>} : vector<16x128xbf16>, vector<128x128xbf16>, vector<16x128xf32> -> vector<16x128xf32>
    %22 = vector.broadcast %1 : vector<1x128xf32> to vector<16x128xf32>
    %23 = arith.addf %21, %22 : vector<16x128xf32>
    %24 = arith.mulf %23, %23 : vector<16x128xf32>
    %cst_13 = arith.constant 0.0356774069 : f32
    %25 = vector.broadcast %cst_13 : f32 to vector<16x128xf32>
    %26 = arith.mulf %25, %24 : vector<16x128xf32>
    %cst_14 = arith.constant 0.797884583 : f32
    %27 = vector.broadcast %cst_14 : f32 to vector<16x128xf32>
    %28 = arith.addf %27, %26 : vector<16x128xf32>
    %29 = arith.mulf %23, %28 : vector<16x128xf32>
    %30 = math.tanh %29 : vector<16x128xf32>
    %cst_15 = arith.constant 5.000000e-01 : f32
    %31 = vector.broadcast %cst_15 : f32 to vector<16x128xf32>
    %32 = arith.mulf %31, %23 : vector<16x128xf32>
    %33 = arith.mulf %32, %30 : vector<16x128xf32>
    %34 = arith.addf %32, %33 : vector<16x128xf32>
    %35 = arith.truncf %34 : vector<16x128xf32> to vector<16x128xbf16>
    %c128_16 = arith.constant 128 : index
    %c0_17 = arith.constant 0 : index
    %36 = vector.load %arg4[%c128_16, %c0_17] : memref<512x128xbf16, #tpu.memory_space<vmem>>, vector<128x128xbf16>
    %cst_18 = arith.constant dense<0.000000e+00> : vector<16x128xf32>
    %37 = tpu.matmul %35, %36, %cst_18 {dimension_numbers = #tpu.dot_dimension_numbers<[1], [0], [0], [1], [0, 0, 1, 1], [], []>} : vector<16x128xbf16>, vector<128x128xbf16>, vector<16x128xf32> -> vector<16x128xf32>
    %38 = arith.addf %19, %37 : vector<16x128xf32>
    %c0_19 = arith.constant 0 : index
    %c256 = arith.constant 256 : index
    %39 = vector.load %arg1[%c0_19, %c256] : memref<16x512xbf16, #tpu.memory_space<vmem>>, vector<16x128xbf16>
    %cst_20 = arith.constant dense<0.000000e+00> : vector<16x128xf32>
    %40 = tpu.matmul %39, %0, %cst_20 {dimension_numbers = #tpu.dot_dimension_numbers<[1], [0], [0], [1], [0, 0, 1, 1], [], []>} : vector<16x128xbf16>, vector<128x128xbf16>, vector<16x128xf32> -> vector<16x128xf32>
    %41 = vector.broadcast %1 : vector<1x128xf32> to vector<16x128xf32>
    %42 = arith.addf %40, %41 : vector<16x128xf32>
    %43 = arith.mulf %42, %42 : vector<16x128xf32>
    %cst_21 = arith.constant 0.0356774069 : f32
    %44 = vector.broadcast %cst_21 : f32 to vector<16x128xf32>
    %45 = arith.mulf %44, %43 : vector<16x128xf32>
    %cst_22 = arith.constant 0.797884583 : f32
    %46 = vector.broadcast %cst_22 : f32 to vector<16x128xf32>
    %47 = arith.addf %46, %45 : vector<16x128xf32>
    %48 = arith.mulf %42, %47 : vector<16x128xf32>
    %49 = math.tanh %48 : vector<16x128xf32>
    %cst_23 = arith.constant 5.000000e-01 : f32
    %50 = vector.broadcast %cst_23 : f32 to vector<16x128xf32>
    %51 = arith.mulf %50, %42 : vector<16x128xf32>
    %52 = arith.mulf %51, %49 : vector<16x128xf32>
    %53 = arith.addf %51, %52 : vector<16x128xf32>
    %54 = arith.truncf %53 : vector<16x128xf32> to vector<16x128xbf16>
    %c256_24 = arith.constant 256 : index
    %c0_25 = arith.constant 0 : index
    %55 = vector.load %arg4[%c256_24, %c0_25] : memref<512x128xbf16, #tpu.memory_space<vmem>>, vector<128x128xbf16>
    %cst_26 = arith.constant dense<0.000000e+00> : vector<16x128xf32>
    %56 = tpu.matmul %54, %55, %cst_26 {dimension_numbers = #tpu.dot_dimension_numbers<[1], [0], [0], [1], [0, 0, 1, 1], [], []>} : vector<16x128xbf16>, vector<128x128xbf16>, vector<16x128xf32> -> vector<16x128xf32>
    %57 = arith.addf %38, %56 : vector<16x128xf32>
    %c0_27 = arith.constant 0 : index
    %c384 = arith.constant 384 : index
    %58 = vector.load %arg1[%c0_27, %c384] : memref<16x512xbf16, #tpu.memory_space<vmem>>, vector<16x128xbf16>
    %cst_28 = arith.constant dense<0.000000e+00> : vector<16x128xf32>
    %59 = tpu.matmul %58, %0, %cst_28 {dimension_numbers = #tpu.dot_dimension_numbers<[1], [0], [0], [1], [0, 0, 1, 1], [], []>} : vector<16x128xbf16>, vector<128x128xbf16>, vector<16x128xf32> -> vector<16x128xf32>
    %60 = vector.broadcast %1 : vector<1x128xf32> to vector<16x128xf32>
    %61 = arith.addf %59, %60 : vector<16x128xf32>
    %62 = arith.mulf %61, %61 : vector<16x128xf32>
    %cst_29 = arith.constant 0.0356774069 : f32
    %63 = vector.broadcast %cst_29 : f32 to vector<16x128xf32>
    %64 = arith.mulf %63, %62 : vector<16x128xf32>
    %cst_30 = arith.constant 0.797884583 : f32
    %65 = vector.broadcast %cst_30 : f32 to vector<16x128xf32>
    %66 = arith.addf %65, %64 : vector<16x128xf32>
    %67 = arith.mulf %61, %66 : vector<16x128xf32>
    %68 = math.tanh %67 : vector<16x128xf32>
    %cst_31 = arith.constant 5.000000e-01 : f32
    %69 = vector.broadcast %cst_31 : f32 to vector<16x128xf32>
    %70 = arith.mulf %69, %61 : vector<16x128xf32>
    %71 = arith.mulf %70, %68 : vector<16x128xf32>
    %72 = arith.addf %70, %71 : vector<16x128xf32>
    %73 = arith.truncf %72 : vector<16x128xf32> to vector<16x128xbf16>
    %c384_32 = arith.constant 384 : index
    %c0_33 = arith.constant 0 : index
    %74 = vector.load %arg4[%c384_32, %c0_33] : memref<512x128xbf16, #tpu.memory_space<vmem>>, vector<128x128xbf16>
    %cst_34 = arith.constant dense<0.000000e+00> : vector<16x128xf32>
    %75 = tpu.matmul %73, %74, %cst_34 {dimension_numbers = #tpu.dot_dimension_numbers<[1], [0], [0], [1], [0, 0, 1, 1], [], []>} : vector<16x128xbf16>, vector<128x128xbf16>, vector<16x128xf32> -> vector<16x128xf32>
    %76 = arith.addf %57, %75 : vector<16x128xf32>
    %c0_35 = arith.constant 0 : index
    %c0_36 = arith.constant 0 : index
    %77 = vector.load %arg5[%c0_35, %c0_36] : memref<1x128xf32, #tpu.memory_space<vmem>>, vector<1x128xf32>
    %78 = vector.broadcast %77 : vector<1x128xf32> to vector<16x128xf32>
    %79 = arith.addf %76, %78 : vector<16x128xf32>
    %80 = arith.mulf %79, %79 : vector<16x128xf32>
    %cst_37 = arith.constant 0.0356774069 : f32
    %81 = vector.broadcast %cst_37 : f32 to vector<16x128xf32>
    %82 = arith.mulf %81, %80 : vector<16x128xf32>
    %cst_38 = arith.constant 0.797884583 : f32
    %83 = vector.broadcast %cst_38 : f32 to vector<16x128xf32>
    %84 = arith.addf %83, %82 : vector<16x128xf32>
    %85 = arith.mulf %79, %84 : vector<16x128xf32>
    %86 = math.tanh %85 : vector<16x128xf32>
    %cst_39 = arith.constant 5.000000e-01 : f32
    %87 = vector.broadcast %cst_39 : f32 to vector<16x128xf32>
    %88 = arith.mulf %87, %79 : vector<16x128xf32>
    %89 = arith.mulf %88, %86 : vector<16x128xf32>
    %90 = arith.addf %88, %89 : vector<16x128xf32>
    %91 = arith.truncf %90 : vector<16x128xf32> to vector<16x128xbf16>
    %c0_40 = arith.constant 0 : index
    %c0_41 = arith.constant 0 : index
    %92 = vector.load %arg6[%c0_40, %c0_41] : memref<16x128xbf16, #tpu.memory_space<vmem>>, vector<16x128xbf16>
    tpu.vector_store %arg6[%c0_40, %c0_41], %91 {strides = array<i32>} : memref<16x128xbf16, #tpu.memory_space<vmem>>, vector<16x128xbf16>,
    return
  }
  func.func @transform_0(%arg0: i32) -> (i32, i32) {
    %c0_i32 = arith.constant 0 : i32
    %c0_i32_0 = arith.constant 0 : i32
    return %arg0, %c0_i32 : i32, i32
  }
  func.func @transform_1(%arg0: i32) -> (i32, i32) {
    %c0_i32 = arith.constant 0 : i32
    %c0_i32_0 = arith.constant 0 : i32
    %c0_i32_1 = arith.constant 0 : i32
    return %c0_i32, %c0_i32_0 : i32, i32
  }
  func.func @transform_2(%arg0: i32) -> (i32, i32) {
    %c0_i32 = arith.constant 0 : i32
    %c0_i32_0 = arith.constant 0 : i32
    %c0_i32_1 = arith.constant 0 : i32
    return %c0_i32, %c0_i32_0 : i32, i32
  }
  func.func @transform_3(%arg0: i32) -> (i32, i32) {
    %c0_i32 = arith.constant 0 : i32
    %c0_i32_0 = arith.constant 0 : i32
    %c0_i32_1 = arith.constant 0 : i32
    return %c0_i32, %c0_i32_0 : i32, i32
  }
  func.func @transform_4(%arg0: i32) -> (i32, i32) {
    %c0_i32 = arith.constant 0 : i32
    %c0_i32_0 = arith.constant 0 : i32
    %c0_i32_1 = arith.constant 0 : i32
    return %c0_i32, %c0_i32_0 : i32, i32
  }
  func.func @transform_5(%arg0: i32) -> (i32, i32) {
    %c0_i32 = arith.constant 0 : i32
    %c0_i32_0 = arith.constant 0 : i32
    return %arg0, %c0_i32 : i32, i32
  }
}

</mosaic_0001>

<llo_original>
// kernel: tile.8
$region0: #{tile.8}
  #allocation0 [shape = 's32[1]{0}', space=sflag, size = 0x4, scoped, tag = 'scoped memory for tile.8']
  %s0 = inlined_call_operand.vmem [shape: f32[32], index: 0, kind: input, shape index: {}]
  %s1 = inlined_call_operand.vmem [shape: f32[4,32], index: 1, kind: output, shape index: {}]
  // Predicated region
  $region2: #{tile.8} parent=0 // pred_check
    _
  $region3: #{tile.8} parent=0 // pred_check_branch
    %3 = sbr.rel (0) target = $region5
  $region4: #{tile.8} parent=0 // pred_region
    _
  $region5: #{tile.8} parent=0 // pred_fallthru
    _
  %v4 = vld [vmem:[%s0] ss:$0 sm:$0xff]
  %5 = vst [vmem:[%s1] sm:$0xf] %v4

// kernel: tile.9
$region0: #{tile.9}
  %s0 = inlined_call_operand.vmem [shape: f32[4,32], index: 0, kind: input, shape index: {}]
  %s1 = inlined_call_operand.vmem [shape: f32[1,128], index: 1, kind: output, shape index: {}]
  $region1: #{tile.9} parent=0
    #allocation0 [shape = 'u8[4096]{0}', space=vmem, size = 0x1000, scoped, tag = 'scoped mem for output reshape']
    #allocation1 [shape = 'u8[4096]{0}', space=vmem, size = 0x1000, scoped, tag = 'scoped mem for input reshape']
    %s3 = sshllo.u32 0, 4
    %v4 = vld [vmem:[%s0] sm:%s3]
    %5 = vst [vmem:[#allocation1] sm:%s3] %v4
    %v6 = vld [vmem:[#allocation1] sm:$0x1]
    %vm7 = vcmask 261120
    %8 = vst.msk [vmem:[#allocation0] sm:$0x1] %vm7, %v6
    %s9 = scalar_lea.vmem [#allocation1], 3
    %v10 = vld [vmem:[%s9] sm:$0x1]
    %11 = vrot.lane.b32.xlu0 %v10, 96
    %v12 = vpop.permute.xlu0 %11
    %vm13 = vcmask 1048320
    %14 = vst.msk [vmem:[#allocation0] sm:$0x1] %vm13, %v12
    %s15 = scalar_lea.vmem [#allocation1], 2
    %v16 = vld [vmem:[%s15] sm:$0x1]
    %17 = vrot.lane.b32.xlu0 %v16, 64
    %v18 = vpop.permute.xlu0 %17
    %vm19 = vcmask 785920
    %20 = vst.msk [vmem:[#allocation0] sm:$0x1] %vm19, %v18
    %s21 = scalar_lea.vmem [#allocation1], 1
    %v22 = vld [vmem:[%s21] sm:$0x1]
    %23 = vrot.lane.b32.xlu0 %v22, 32
    %v24 = vpop.permute.xlu0 %23
    %vm25 = vcmask 523520
    %26 = vst.msk [vmem:[#allocation0] sm:$0x1] %vm25, %v24
    %s28 = sshllo.u32 0, 1
    %v30 = vld [vmem:[#allocation0] sm:%s28]
    %s31 = sshllo.u32 0, 1
    %32 = vst [vmem:[%s1] sm:%s31] %v30

// kernel: predictor_forward.1
$region0: #{predictor_forward.1}
  #allocation0 [shape = 'u32[]', space=smem, size = 0x4, offset = 0x4, fixed_abs, tag = 'smem constant byte address 0x4 - core index']
  #allocation1 [shape = 'u32[144,128]{1,0:T(1,128)}', space=vmem, size = 0x12000, scoped, tag = 'internal scratch']
  %s0 = inlined_call_operand.vmem [shape: bf16[32,512], index: 0, kind: input, shape index: {}]
  %s1 = inlined_call_operand.vmem [shape: bf16[128,128], index: 1, kind: input, shape index: {}]
  %s2 = inlined_call_operand.vmem [shape: f32[1,128], index: 2, kind: input, shape index: {}]
  %s3 = inlined_call_operand.vmem [shape: bf16[512,128], index: 3, kind: input, shape index: {}]
  %s4 = inlined_call_operand.vmem [shape: f32[1,128], index: 4, kind: input, shape index: {}]
  %s5 = inlined_call_operand.vmem [shape: bf16[32,128], index: 5, kind: output, shape index: {}]
  %s6 = sld [smem:[#allocation0]]
  $region53: #{predictor_forward.1} parent=0
    _
  %s8 = ssub.s32 1, %s6
  %s9 = scalar_select 0, %s8, %s6
  loop: start=0, step=1, limit=4
  $region2: #{predictor_forward.1} parent=0 // loop_pre_header
    _
  $region3: #{predictor_forward.1} parent=0 // loop_header
    %s11 = sphi 0, %s15
    %p12 = scmp.ge.s32.totalorder %s11, 4
    %s21 = sphi 0, %s23
    %s24 = sphi 0, %s21
    %s25 = sphi 0, %s24
    %s41 = sphi 0, %s25
    %s45 = sphi 0, %s45
    %s47 = sphi 0, %s45
    %s48 = sphi 0, %s47
    %s62 = sphi 0, %s48
    %s66 = sphi 0, %s66
    %s68 = sphi 0, %s66
    %s69 = sphi 0, %s68
    %s83 = sphi 0, %s69
    %s87 = sphi 0, %s87
    %s89 = sphi 0, %s87
    %s90 = sphi 0, %s89
    %s104 = sphi 0, %s90
    %s108 = sphi 0, %s108
    %s110 = sphi 0, %s108
    %s111 = sphi 0, %s110
    %s125 = sphi 0, %s111
    %s131 = sphi 0, %s133
    %s134 = sphi 0, %s131
    %s135 = sphi 0, %s134
    %s151 = sphi 0, %s135
  $region4: #{predictor_forward.1} parent=0 // loop_header_branch
    %14 = sbr.rel (%p12) target = $region8
  $region5: #{predictor_forward.1} parent=0 // loop_body
    %s16 = ssub.s32 %s11, 1
    %s17 = ssub.s32 %s11, 2
    %s18 = sadd.s32 %s11, 1
    %s19 = ssub.s32 %s11, %s18
    %p20 = scmp.eq.s32.totalorder %s19, 0
    %s22 = sadd.s32 %s21, 1
    %s23 = scalar_select %p20, %s21, %s22
    %p26 = pneg %p20
    %p27 = scmp.eq.s32.totalorder %s11, 1
    %p28 = por %p26, %p27
    %p29 = scmp.ne.s32.totalorder %s21, %s24
    %p30 = scmp.eq.s32.totalorder %s11, 0
    %p31 = por %p29, %p30
    %p32 = scmp.ne.s32.totalorder %s21, %s24
    %p33 = scmp.eq.s32.totalorder %s16, 1
    %p34 = por %p32, %p33
    %p35 = scmp.ne.s32.totalorder %s24, %s25
    %p36 = scmp.eq.s32.totalorder %s16, 0
    %p37 = por %p35, %p36
    %p38 = scmp.ne.s32.totalorder %s24, %s25
    %p39 = scmp.eq.s32.totalorder %s17, 1
    %p40 = por %p38, %p39
    %p42 = scmp.ne.s32.totalorder %s25, %s41
    %p43 = scmp.eq.s32.totalorder %s17, 0
    %p44 = por %p42, %p43
    %s46 = sadd.s32 %s45, 1
    %p49 = scmp.eq.s32.totalorder %s11, 1
    %p50 = scmp.ne.s32.totalorder %s45, %s47
    %p51 = scmp.eq.s32.totalorder %s11, 0
    %p52 = por %p50, %p51
    %p53 = scmp.ne.s32.totalorder %s45, %s47
    %p54 = scmp.eq.s32.totalorder %s16, 1
    %p55 = por %p53, %p54
    %p56 = scmp.ne.s32.totalorder %s47, %s48
    %p57 = scmp.eq.s32.totalorder %s16, 0
    %p58 = por %p56, %p57
    %p59 = scmp.ne.s32.totalorder %s47, %s48
    %p60 = scmp.eq.s32.totalorder %s17, 1
    %p61 = por %p59, %p60
    %p63 = scmp.ne.s32.totalorder %s48, %s62
    %p64 = scmp.eq.s32.totalorder %s17, 0
    %p65 = por %p63, %p64
    %s67 = sadd.s32 %s66, 1
    %p70 = scmp.eq.s32.totalorder %s11, 1
    %p71 = scmp.ne.s32.totalorder %s66, %s68
    %p72 = scmp.eq.s32.totalorder %s11, 0
    %p73 = por %p71, %p72
    %p74 = scmp.ne.s32.totalorder %s66, %s68
    %p75 = scmp.eq.s32.totalorder %s16, 1
    %p76 = por %p74, %p75
    %p77 = scmp.ne.s32.totalorder %s68, %s69
    %p78 = scmp.eq.s32.totalorder %s16, 0
    %p79 = por %p77, %p78
    %p80 = scmp.ne.s32.totalorder %s68, %s69
    %p81 = scmp.eq.s32.totalorder %s17, 1
    %p82 = por %p80, %p81
    %p84 = scmp.ne.s32.totalorder %s69, %s83
    %p85 = scmp.eq.s32.totalorder %s17, 0
    %p86 = por %p84, %p85
    %s88 = sadd.s32 %s87, 1
    %p91 = scmp.eq.s32.totalorder %s11, 1
    %p92 = scmp.ne.s32.totalorder %s87, %s89
    %p93 = scmp.eq.s32.totalorder %s11, 0
    %p94 = por %p92, %p93
    %p95 = scmp.ne.s32.totalorder %s87, %s89
    %p96 = scmp.eq.s32.totalorder %s16, 1
    %p97 = por %p95, %p96
    %p98 = scmp.ne.s32.totalorder %s89, %s90
    %p99 = scmp.eq.s32.totalorder %s16, 0
    %p100 = por %p98, %p99
    %p101 = scmp.ne.s32.totalorder %s89, %s90
    %p102 = scmp.eq.s32.totalorder %s17, 1
    %p103 = por %p101, %p102
    %p105 = scmp.ne.s32.totalorder %s90, %s104
    %p106 = scmp.eq.s32.totalorder %s17, 0
    %p107 = por %p105, %p106
    %s109 = sadd.s32 %s108, 1
    %p112 = scmp.eq.s32.totalorder %s11, 1
    %p113 = scmp.ne.s32.totalorder %s108, %s110
    %p114 = scmp.eq.s32.totalorder %s11, 0
    %p115 = por %p113, %p114
    %p116 = scmp.ne.s32.totalorder %s108, %s110
    %p117 = scmp.eq.s32.totalorder %s16, 1
    %p118 = por %p116, %p117
    %p119 = scmp.ne.s32.totalorder %s110, %s111
    %p120 = scmp.eq.s32.totalorder %s16, 0
    %p121 = por %p119, %p120
    %p122 = scmp.ne.s32.totalorder %s110, %s111
    %p123 = scmp.eq.s32.totalorder %s17, 1
    %p124 = por %p122, %p123
    %p126 = scmp.ne.s32.totalorder %s111, %s125
    %p127 = scmp.eq.s32.totalorder %s17, 0
    %p128 = por %p126, %p127
    %s129 = ssub.s32 %s11, %s18
    %p130 = scmp.eq.s32.totalorder %s129, 0
    %s132 = sadd.s32 %s131, 1
    %s133 = scalar_select %p130, %s131, %s132
    %p136 = pneg %p130
    %p137 = scmp.eq.s32.totalorder %s11, 1
    %p138 = por %p136, %p137
    %p139 = scmp.ne.s32.totalorder %s131, %s134
    %p140 = scmp.eq.s32.totalorder %s11, 0
    %p141 = por %p139, %p140
    %p142 = scmp.ne.s32.totalorder %s131, %s134
    %p143 = scmp.eq.s32.totalorder %s16, 1
    %p144 = por %p142, %p143
    %p145 = scmp.ne.s32.totalorder %s134, %s135
    %p146 = scmp.eq.s32.totalorder %s16, 0
    %p147 = por %p145, %p146
    %p148 = scmp.ne.s32.totalorder %s134, %s135
    %p149 = scmp.eq.s32.totalorder %s17, 1
    %p150 = por %p148, %p149
    %p152 = scmp.ne.s32.totalorder %s135, %s151
    %p153 = scmp.eq.s32.totalorder %s17, 0
    %p154 = por %p152, %p153
    %p155 = scmp.le.s32.totalorder 1, %s11
    %p156 = scmp.lt.s32.totalorder %s11, 3
    %p157 = pnand %p155, %p156
    %p158 = pneg %p157
    // Predicated region
    $region9: #{predictor_forward.1} parent=5 // pred_check
      _
    $region10: #{predictor_forward.1} parent=5 // pred_check_branch
      %160 = sbr.rel (%p157) target = $region12
    $region11: #{predictor_forward.1} parent=5 // pred_region
      %s161 = ssub.s32 %s11, 1
      // Predicated region
      $region13: #{predictor_forward.1} parent=11 // pred_check
        %p162 = pneg %p58
      $region14: #{predictor_forward.1} parent=11 // pred_check_branch
        %164 = sbr.rel (%p162) target = $region16
      $region15: #{predictor_forward.1} parent=11 // pred_region
        _
      $region16: #{predictor_forward.1} parent=11 // pred_fallthru
        _
      // Predicated region
      $region17: #{predictor_forward.1} parent=11 // pred_check
        %p165 = pneg %p79
      $region18: #{predictor_forward.1} parent=11 // pred_check_branch
        %167 = sbr.rel (%p165) target = $region20
      $region19: #{predictor_forward.1} parent=11 // pred_region
        _
      $region20: #{predictor_forward.1} parent=11 // pred_fallthru
        _
      // Predicated region
      $region21: #{predictor_forward.1} parent=11 // pred_check
        %p168 = pneg %p100
      $region22: #{predictor_forward.1} parent=11 // pred_check_branch
        %170 = sbr.rel (%p168) target = $region24
      $region23: #{predictor_forward.1} parent=11 // pred_region
        _
      $region24: #{predictor_forward.1} parent=11 // pred_fallthru
        _
      // Predicated region
      $region25: #{predictor_forward.1} parent=11 // pred_check
        %p171 = pneg %p121
      $region26: #{predictor_forward.1} parent=11 // pred_check_branch
        %173 = sbr.rel (%p171) target = $region28
      $region27: #{predictor_forward.1} parent=11 // pred_region
        _
      $region28: #{predictor_forward.1} parent=11 // pred_fallthru
        _
    $region12: #{predictor_forward.1} parent=5 // pred_fallthru
      _
    %p174 = scmp.lt.s32.totalorder %s11, 2
    // Predicated region
    $region29: #{predictor_forward.1} parent=5 // pred_check
      %p175 = pneg %p174
    $region30: #{predictor_forward.1} parent=5 // pred_check_branch
      %177 = sbr.rel (%p175) target = $region32
    $region31: #{predictor_forward.1} parent=5 // pred_region
      // Predicated region
      $region33: #{predictor_forward.1} parent=31 // pred_check
        %p178 = pneg %p31
      $region34: #{predictor_forward.1} parent=31 // pred_check_branch
        %180 = sbr.rel (%p178) target = $region36
      $region35: #{predictor_forward.1} parent=31 // pred_region
        %s181 = smul.u32 2, %s11
        %p182 = scmp.lt.s32.totalorder %s181, 3
        %s183 = scalar_select %p182, %s181, 3
        %s184 = smul.addr %s183, 4
        %s185 = smul.addr %s184, 4
        %s186 = scalar_lea.vmem %s0, %s185
        %s187 = smul.u32 2, %s11
      $region36: #{predictor_forward.1} parent=31 // pred_fallthru
        _
    $region32: #{predictor_forward.1} parent=5 // pred_fallthru
      _
    %p188 = scmp.le.s32.totalorder 1, %s11
    %p189 = scmp.lt.s32.totalorder %s11, 3
    %p190 = pnand %p188, %p189
    %p191 = pneg %p190
    // Predicated region
    $region37: #{predictor_forward.1} parent=5 // pred_check
      _
    $region38: #{predictor_forward.1} parent=5 // pred_check_branch
      %193 = sbr.rel (%p190) target = $region40
    $region39: #{predictor_forward.1} parent=5 // pred_region
      %s194 = ssub.s32 %s11, 1
      %s195 = smul.u32 2, %s16
      %p196 = scmp.lt.s32.totalorder %s195, 3
      %s197 = scalar_select %p196, %s195, 3
      %s198 = smul.addr %s197, 4
      %s199 = smul.addr %s198, 4
      %s200 = scalar_lea.vmem %s0, %s199
      %p201 = pneg %p37
      %p202 = pneg %p34
      %p203 = pneg %p58
      %p204 = pneg %p55
      %p205 = pneg %p79
      %p206 = pneg %p76
      %p207 = pneg %p100
      %p208 = pneg %p97
      %p209 = pneg %p121
      %p210 = pneg %p118
      %p211 = pneg %p147
      %p212 = pneg %p144
      %s213 = smul.u32 2, %s16
      %p214 = scmp.lt.s32.totalorder %s213, 3
      %s215 = scalar_select %p214, %s213, 3
      %s216 = smul.addr %s215, 4
      %s217 = scalar_lea.vmem %s5, %s216
      %s218 = smul.u32 2, %s16
      %p219 = scmp.lt.s32.totalorder %s218, 3
      %s220 = scalar_select %p219, %s218, 3
      %s221 = smul.addr %s220, 4
      %s222 = smul.addr %s221, 4
      %s223 = scalar_lea.vmem %s0, %s222
      %s224 = smul.u32 2, %s16
      %s225 = smul.u32 2, %s16
      %p226 = scmp.lt.s32.totalorder %s225, 3
      %s227 = scalar_select %p226, %s225, 3
      %s228 = smul.addr %s227, 4
      %s229 = scalar_lea.vmem %s5, %s228
      %s230 = smul.u32 2, %s16
      %v232 = vld [vmem:[%s1] sm:$0xf]
      %v233 = vld [vmem:[%s1 + $0x4] sm:$0xf]
      %v234 = vld [vmem:[%s1 + $0x8] sm:$0xf]
      %v235 = vld [vmem:[%s1 + $0xc] sm:$0xf]
      %v236 = vld [vmem:[%s1 + $0x10] sm:$0xf]
      %v237 = vld [vmem:[%s1 + $0x14] sm:$0xf]
      %v238 = vld [vmem:[%s1 + $0x18] sm:$0xf]
      %v239 = vld [vmem:[%s1 + $0x1c] sm:$0xf]
      %v240 = vld [vmem:[%s1 + $0x20] sm:$0xf]
      %v241 = vld [vmem:[%s1 + $0x24] sm:$0xf]
      %v242 = vld [vmem:[%s1 + $0x28] sm:$0xf]
      %v243 = vld [vmem:[%s1 + $0x2c] sm:$0xf]
      %v244 = vld [vmem:[%s1 + $0x30] sm:$0xf]
      %v245 = vld [vmem:[%s1 + $0x34] sm:$0xf]
      %v246 = vld [vmem:[%s1 + $0x38] sm:$0xf]
      %v247 = vld [vmem:[%s1 + $0x3c] sm:$0xf]
      %v248 = vld [vmem:[%s2] sm:$0x1]
      %v249 = vld [vmem:[%s223] sm:$0xf]
      %v250 = vld [vmem:[%s223 + $0x10] sm:$0xf]
      %v252 = vlaneseq
      %v253 = vshrl.u32 %v252, 7
      %v254 = vsub.s32 0, %v253
      %v255 = vrot.slane %v248, %v254
      %v259 = vunpack.c.l.b16 %v249
      %v260 = vunpack.c.l.b16 %v250
      %v261 = vpack.c.b16 %v260, %v259
      %v279 = vunpack.c.l.b16 %v232
      %v280 = vunpack.c.l.b16 %v233
      %v281 = vunpack.c.l.b16 %v234
      %v282 = vunpack.c.l.b16 %v235
      %v283 = vunpack.c.l.b16 %v236
      %v284 = vunpack.c.l.b16 %v237
      %v285 = vunpack.c.l.b16 %v238
      %v286 = vunpack.c.l.b16 %v239
      %v287 = vunpack.c.l.b16 %v240
      %v288 = vunpack.c.l.b16 %v241
      %v289 = vunpack.c.l.b16 %v242
      %v290 = vunpack.c.l.b16 %v243
      %v291 = vunpack.c.l.b16 %v244
      %v292 = vunpack.c.l.b16 %v245
      %v293 = vunpack.c.l.b16 %v246
      %v294 = vunpack.c.l.b16 %v247
      %v295 = vpack.c.b16 %v280, %v279
      %v296 = vpack.c.b16 %v282, %v281
      %v297 = vpack.c.b16 %v284, %v283
      %v298 = vpack.c.b16 %v286, %v285
      %v299 = vpack.c.b16 %v288, %v287
      %v300 = vpack.c.b16 %v290, %v289
      %v301 = vpack.c.b16 %v292, %v291
      %v302 = vpack.c.b16 %v294, %v293
      %311 = vmatprep.subr.bf16.mxu0 0
      %312 = vmatpush1.bf16.msra.mxu0 %v295
      %313 = vmatprep.subr.bf16.mxu0 0
      %314 = vmatpush1.bf16.msra.mxu0 %v296
      %315 = vmatprep.subr.bf16.mxu0 0
      %316 = vmatpush1.bf16.msra.mxu0 %v297
      %317 = vmatprep.subr.bf16.mxu0 0
      %318 = vmatpush1.bf16.msra.mxu0 %v298
      %319 = vmatprep.subr.bf16.mxu0 0
      %320 = vmatpush1.bf16.msra.mxu0 %v299
      %321 = vmatprep.subr.bf16.mxu0 0
      %322 = vmatpush1.bf16.msra.mxu0 %v300
      %323 = vmatprep.subr.bf16.mxu0 0
      %324 = vmatpush1.bf16.msra.mxu0 %v301
      %325 = vmatprep.subr.bf16.mxu0 0
      %326 = vmatpush1.bf16.msra.mxu0 %v302
      %327 = vmatprep.subr.bf16.mxu0 0
      %328 = vmatpush1.bf16.msra.mxu0 0
      %329 = vmatprep.subr.bf16.mxu0 0
      %330 = vmatpush1.bf16.msra.mxu0 0
      %331 = vmatprep.subr.bf16.mxu0 0
      %332 = vmatpush1.bf16.msra.mxu0 0
      %333 = vmatprep.subr.bf16.mxu0 0
      %334 = vmatpush1.bf16.msra.mxu0 0
      %335 = vmatprep.subr.bf16.mxu0 0
      %336 = vmatpush1.bf16.msra.mxu0 0
      %337 = vmatprep.subr.bf16.mxu0 0
      %338 = vmatpush1.bf16.msra.mxu0 0
      %339 = vmatprep.subr.bf16.mxu0 0
      %340 = vmatpush1.bf16.msra.mxu0 0
      %341 = vmatprep.subr.bf16.mxu0 0
      %342 = vmatpush1.bf16.msra.mxu0 0
      %343 = vmatprep.mubr.bf16.mxu0 0
      %344 = vmatmul.mubr.bf16.gmra.mrb[0].mxu0 %v261
      %v345 = vpop.f32.mrb[0].mxu0
      %v346 = vadd.f32 %v255, %v345
      %v347 = vpop.f32.mrb[0].mxu0
      %v348 = vpop.f32.mrb[0].mxu0
      %v349 = vadd.f32 %v255, %v348
      %v350 = vpop.f32.mrb[0].mxu0
      %351 = vdwg.mxu0
      %v352 = vmul.f32 %v346, %v346
      %v353 = vmul.f32 %v349, %v349
      %v354 = vmul.f32 %v352, 0.035677407
      %v355 = vmul.f32 %v353, 0.035677407
      %v356 = vadd.f32 %v354, 0.7978846
      %v357 = vadd.f32 %v355, 0.7978846
      %v358 = vmul.f32 %v346, %v356
      %v359 = vmul.f32 %v349, %v357
      %v360 = vtanh.pop %v358
      %v361 = vtanh.pop %v359
      %v362 = vmul.f32 %v346, 0.5
      %v363 = vmul.f32 %v349, 0.5
      %v364 = vmul.f32 %v362, %v360
      %v365 = vmul.f32 %v363, %v361
      %v366 = vadd.f32 %v362, %v364
      %v367 = vadd.f32 %v363, %v365
      %v368 = vpack.c.bf16 %v367, %v366
      %v369 = vld [vmem:[%s3] sm:$0xf]
      %v370 = vld [vmem:[%s3 + $0x4] sm:$0xf]
      %v371 = vld [vmem:[%s3 + $0x8] sm:$0xf]
      %v372 = vld [vmem:[%s3 + $0xc] sm:$0xf]
      %v373 = vld [vmem:[%s3 + $0x10] sm:$0xf]
      %v374 = vld [vmem:[%s3 + $0x14] sm:$0xf]
      %v375 = vld [vmem:[%s3 + $0x18] sm:$0xf]
      %v376 = vld [vmem:[%s3 + $0x1c] sm:$0xf]
      %v377 = vld [vmem:[%s3 + $0x20] sm:$0xf]
      %v378 = vld [vmem:[%s3 + $0x24] sm:$0xf]
      %v379 = vld [vmem:[%s3 + $0x28] sm:$0xf]
      %v380 = vld [vmem:[%s3 + $0x2c] sm:$0xf]
      %v381 = vld [vmem:[%s3 + $0x30] sm:$0xf]
      %v382 = vld [vmem:[%s3 + $0x34] sm:$0xf]
      %v383 = vld [vmem:[%s3 + $0x38] sm:$0xf]
      %v384 = vld [vmem:[%s3 + $0x3c] sm:$0xf]
      %v385 = vld [vmem:[%s223 + $0x4] sm:$0xf]
      %v386 = vld [vmem:[%s223 + $0x14] sm:$0xf]
      %v389 = vunpack.c.l.b16 %v385
      %v390 = vunpack.c.l.b16 %v386
      %v391 = vpack.c.b16 %v390, %v389
      %393 = vmatprep.subr.bf16.mxu0 0
      %394 = vmatpush1.bf16.msra.mxu0 %v295
      %395 = vmatprep.subr.bf16.mxu0 0
      %396 = vmatpush1.bf16.msra.mxu0 %v296
      %397 = vmatprep.subr.bf16.mxu0 0
      %398 = vmatpush1.bf16.msra.mxu0 %v297
      %399 = vmatprep.subr.bf16.mxu0 0
      %400 = vmatpush1.bf16.msra.mxu0 %v298
      %401 = vmatprep.subr.bf16.mxu0 0
      %402 = vmatpush1.bf16.msra.mxu0 %v299
      %403 = vmatprep.subr.bf16.mxu0 0
      %404 = vmatpush1.bf16.msra.mxu0 %v300
      %405 = vmatprep.subr.bf16.mxu0 0
      %406 = vmatpush1.bf16.msra.mxu0 %v301
      %407 = vmatprep.subr.bf16.mxu0 0
      %408 = vmatpush1.bf16.msra.mxu0 %v302
      %409 = vmatprep.subr.bf16.mxu0 0
      %410 = vmatpush1.bf16.msra.mxu0 0
      %411 = vmatprep.subr.bf16.mxu0 0
      %412 = vmatpush1.bf16.msra.mxu0 0
      %413 = vmatprep.subr.bf16.mxu0 0
      %414 = vmatpush1.bf16.msra.mxu0 0
      %415 = vmatprep.subr.bf16.mxu0 0
      %416 = vmatpush1.bf16.msra.mxu0 0
      %417 = vmatprep.subr.bf16.mxu0 0
      %418 = vmatpush1.bf16.msra.mxu0 0
      %419 = vmatprep.subr.bf16.mxu0 0
      %420 = vmatpush1.bf16.msra.mxu0 0
      %421 = vmatprep.subr.bf16.mxu0 0
      %422 = vmatpush1.bf16.msra.mxu0 0
      %423 = vmatprep.subr.bf16.mxu0 0
      %424 = vmatpush1.bf16.msra.mxu0 0
      %425 = vmatprep.mubr.bf16.mxu0 0
      %426 = vmatmul.mubr.bf16.gmra.mrb[0].mxu0 %v391
      %v427 = vpop.f32.mrb[0].mxu0
      %v428 = vadd.f32 %v255, %v427
      %v429 = vpop.f32.mrb[0].mxu0
      %v430 = vpop.f32.mrb[0].mxu0
      %v431 = vadd.f32 %v255, %v430
      %v432 = vpop.f32.mrb[0].mxu0
      %433 = vdwg.mxu0
      %v434 = vmul.f32 %v428, %v428
      %v435 = vmul.f32 %v431, %v431
      %v436 = vmul.f32 %v434, 0.035677407
      %v437 = vmul.f32 %v435, 0.035677407
      %v438 = vadd.f32 %v436, 0.7978846
      %v439 = vadd.f32 %v437, 0.7978846
      %v440 = vmul.f32 %v428, %v438
      %v441 = vmul.f32 %v431, %v439
      %v442 = vtanh.pop %v440
      %v443 = vtanh.pop %v441
      %v444 = vmul.f32 %v428, 0.5
      %v445 = vmul.f32 %v431, 0.5
      %v446 = vmul.f32 %v444, %v442
      %v447 = vmul.f32 %v445, %v443
      %v448 = vadd.f32 %v444, %v446
      %v449 = vadd.f32 %v445, %v447
      %v450 = vpack.c.bf16 %v449, %v448
      %v451 = vld [vmem:[%s3 + $0x40] sm:$0xf]
      %v452 = vld [vmem:[%s3 + $0x44] sm:$0xf]
      %v453 = vld [vmem:[%s3 + $0x48] sm:$0xf]
      %v454 = vld [vmem:[%s3 + $0x4c] sm:$0xf]
      %v455 = vld [vmem:[%s3 + $0x50] sm:$0xf]
      %v456 = vld [vmem:[%s3 + $0x54] sm:$0xf]
      %v457 = vld [vmem:[%s3 + $0x58] sm:$0xf]
      %v458 = vld [vmem:[%s3 + $0x5c] sm:$0xf]
      %v459 = vld [vmem:[%s3 + $0x60] sm:$0xf]
      %v460 = vld [vmem:[%s3 + $0x64] sm:$0xf]
      %v461 = vld [vmem:[%s3 + $0x68] sm:$0xf]
      %v462 = vld [vmem:[%s3 + $0x6c] sm:$0xf]
      %v463 = vld [vmem:[%s3 + $0x70] sm:$0xf]
      %v464 = vld [vmem:[%s3 + $0x74] sm:$0xf]
      %v465 = vld [vmem:[%s3 + $0x78] sm:$0xf]
      %v466 = vld [vmem:[%s3 + $0x7c] sm:$0xf]
      %v483 = vunpack.c.l.b16 %v451
      %v484 = vunpack.c.l.b16 %v452
      %v485 = vunpack.c.l.b16 %v453
      %v486 = vunpack.c.l.b16 %v454
      %v487 = vunpack.c.l.b16 %v455
      %v488 = vunpack.c.l.b16 %v456
      %v489 = vunpack.c.l.b16 %v457
      %v490 = vunpack.c.l.b16 %v458
      %v491 = vunpack.c.l.b16 %v459
      %v492 = vunpack.c.l.b16 %v460
      %v493 = vunpack.c.l.b16 %v461
      %v494 = vunpack.c.l.b16 %v462
      %v495 = vunpack.c.l.b16 %v463
      %v496 = vunpack.c.l.b16 %v464
      %v497 = vunpack.c.l.b16 %v465
      %v498 = vunpack.c.l.b16 %v466
      %v499 = vpack.c.b16 %v484, %v483
      %v500 = vpack.c.b16 %v486, %v485
      %v501 = vpack.c.b16 %v488, %v487
      %v502 = vpack.c.b16 %v490, %v489
      %v503 = vpack.c.b16 %v492, %v491
      %v504 = vpack.c.b16 %v494, %v493
      %v505 = vpack.c.b16 %v496, %v495
      %v506 = vpack.c.b16 %v498, %v497
      %515 = vmatprep.subr.bf16.mxu0 0
      %516 = vmatpush1.bf16.msra.mxu0 %v499
      %517 = vmatprep.subr.bf16.mxu0 0
      %518 = vmatpush1.bf16.msra.mxu0 %v500
      %519 = vmatprep.subr.bf16.mxu0 0
      %520 = vmatpush1.bf16.msra.mxu0 %v501
      %521 = vmatprep.subr.bf16.mxu0 0
      %522 = vmatpush1.bf16.msra.mxu0 %v502
      %523 = vmatprep.subr.bf16.mxu0 0
      %524 = vmatpush1.bf16.msra.mxu0 %v503
      %525 = vmatprep.subr.bf16.mxu0 0
      %526 = vmatpush1.bf16.msra.mxu0 %v504
      %527 = vmatprep.subr.bf16.mxu0 0
      %528 = vmatpush1.bf16.msra.mxu0 %v505
      %529 = vmatprep.subr.bf16.mxu0 0
      %530 = vmatpush1.bf16.msra.mxu0 %v506
      %531 = vmatprep.subr.bf16.mxu0 0
      %532 = vmatpush1.bf16.msra.mxu0 0
      %533 = vmatprep.subr.bf16.mxu0 0
      %534 = vmatpush1.bf16.msra.mxu0 0
      %535 = vmatprep.subr.bf16.mxu0 0
      %536 = vmatpush1.bf16.msra.mxu0 0
      %537 = vmatprep.subr.bf16.mxu0 0
      %538 = vmatpush1.bf16.msra.mxu0 0
      %539 = vmatprep.subr.bf16.mxu0 0
      %540 = vmatpush1.bf16.msra.mxu0 0
      %541 = vmatprep.subr.bf16.mxu0 0
      %542 = vmatpush1.bf16.msra.mxu0 0
      %543 = vmatprep.subr.bf16.mxu0 0
      %544 = vmatpush1.bf16.msra.mxu0 0
      %545 = vmatprep.subr.bf16.mxu0 0
      %546 = vmatpush1.bf16.msra.mxu0 0
      %547 = vmatprep.mubr.bf16.mxu0 0
      %548 = vmatmul.mubr.bf16.gmra.mrb[0].mxu0 %v450
      %v549 = vpop.f32.mrb[0].mxu0
      %v550 = vadd.f32 0.0, %v549
      %v551 = vpop.f32.mrb[0].mxu0
      %v552 = vpop.f32.mrb[0].mxu0
      %v553 = vadd.f32 0.0, %v552
      %v554 = vpop.f32.mrb[0].mxu0
      %555 = vdwg.mxu0
      %v572 = vunpack.c.l.b16 %v369
      %v573 = vunpack.c.l.b16 %v370
      %v574 = vunpack.c.l.b16 %v371
      %v575 = vunpack.c.l.b16 %v372
      %v576 = vunpack.c.l.b16 %v373
      %v577 = vunpack.c.l.b16 %v374
      %v578 = vunpack.c.l.b16 %v375
      %v579 = vunpack.c.l.b16 %v376
      %v580 = vunpack.c.l.b16 %v377
      %v581 = vunpack.c.l.b16 %v378
      %v582 = vunpack.c.l.b16 %v379
      %v583 = vunpack.c.l.b16 %v380
      %v584 = vunpack.c.l.b16 %v381
      %v585 = vunpack.c.l.b16 %v382
      %v586 = vunpack.c.l.b16 %v383
      %v587 = vunpack.c.l.b16 %v384
      %v588 = vpack.c.b16 %v573, %v572
      %v589 = vpack.c.b16 %v575, %v574
      %v590 = vpack.c.b16 %v577, %v576
      %v591 = vpack.c.b16 %v579, %v578
      %v592 = vpack.c.b16 %v581, %v580
      %v593 = vpack.c.b16 %v583, %v582
      %v594 = vpack.c.b16 %v585, %v584
      %v595 = vpack.c.b16 %v587, %v586
      %604 = vmatprep.subr.bf16.mxu0 0
      %605 = vmatpush1.bf16.msra.mxu0 %v588
      %606 = vmatprep.subr.bf16.mxu0 0
      %607 = vmatpush1.bf16.msra.mxu0 %v589
      %608 = vmatprep.subr.bf16.mxu0 0
      %609 = vmatpush1.bf16.msra.mxu0 %v590
      %610 = vmatprep.subr.bf16.mxu0 0
      %611 = vmatpush1.bf16.msra.mxu0 %v591
      %612 = vmatprep.subr.bf16.mxu0 0
      %613 = vmatpush1.bf16.msra.mxu0 %v592
      %614 = vmatprep.subr.bf16.mxu0 0
      %615 = vmatpush1.bf16.msra.mxu0 %v593
      %616 = vmatprep.subr.bf16.mxu0 0
      %617 = vmatpush1.bf16.msra.mxu0 %v594
      %618 = vmatprep.subr.bf16.mxu0 0
      %619 = vmatpush1.bf16.msra.mxu0 %v595
      %620 = vmatprep.subr.bf16.mxu0 0
      %621 = vmatpush1.bf16.msra.mxu0 0
      %622 = vmatprep.subr.bf16.mxu0 0
      %623 = vmatpush1.bf16.msra.mxu0 0
      %624 = vmatprep.subr.bf16.mxu0 0
      %625 = vmatpush1.bf16.msra.mxu0 0
      %626 = vmatprep.subr.bf16.mxu0 0
      %627 = vmatpush1.bf16.msra.mxu0 0
      %628 = vmatprep.subr.bf16.mxu0 0
      %629 = vmatpush1.bf16.msra.mxu0 0
      %630 = vmatprep.subr.bf16.mxu0 0
      %631 = vmatpush1.bf16.msra.mxu0 0
      %632 = vmatprep.subr.bf16.mxu0 0
      %633 = vmatpush1.bf16.msra.mxu0 0
      %634 = vmatprep.subr.bf16.mxu0 0
      %635 = vmatpush1.bf16.msra.mxu0 0
      %636 = vmatprep.mubr.bf16.mxu0 0
      %637 = vmatmul.mubr.bf16.gmra.mrb[0].mxu0 %v368
      %v638 = vpop.f32.mrb[0].mxu0
      %v639 = vadd.f32 %v550, %v638
      %v640 = vpop.f32.mrb[0].mxu0
      %v641 = vpop.f32.mrb[0].mxu0
      %v642 = vadd.f32 %v553, %v641
      %v643 = vpop.f32.mrb[0].mxu0
      %644 = vdwg.mxu0
      %v645 = vld [vmem:[%s223 + $0x8] sm:$0xf]
      %v646 = vld [vmem:[%s223 + $0x18] sm:$0xf]
      %v649 = vunpack.c.l.b16 %v645
      %v650 = vunpack.c.l.b16 %v646
      %v651 = vpack.c.b16 %v650, %v649
      %653 = vmatprep.subr.bf16.mxu0 0
      %654 = vmatpush1.bf16.msra.mxu0 %v295
      %655 = vmatprep.subr.bf16.mxu0 0
      %656 = vmatpush1.bf16.msra.mxu0 %v296
      %657 = vmatprep.subr.bf16.mxu0 0
      %658 = vmatpush1.bf16.msra.mxu0 %v297
      %659 = vmatprep.subr.bf16.mxu0 0
      %660 = vmatpush1.bf16.msra.mxu0 %v298
      %661 = vmatprep.subr.bf16.mxu0 0
      %662 = vmatpush1.bf16.msra.mxu0 %v299
      %663 = vmatprep.subr.bf16.mxu0 0
      %664 = vmatpush1.bf16.msra.mxu0 %v300
      %665 = vmatprep.subr.bf16.mxu0 0
      %666 = vmatpush1.bf16.msra.mxu0 %v301
      %667 = vmatprep.subr.bf16.mxu0 0
      %668 = vmatpush1.bf16.msra.mxu0 %v302
      %669 = vmatprep.subr.bf16.mxu0 0
      %670 = vmatpush1.bf16.msra.mxu0 0
      %671 = vmatprep.subr.bf16.mxu0 0
      %672 = vmatpush1.bf16.msra.mxu0 0
      %673 = vmatprep.subr.bf16.mxu0 0
      %674 = vmatpush1.bf16.msra.mxu0 0
      %675 = vmatprep.subr.bf16.mxu0 0
      %676 = vmatpush1.bf16.msra.mxu0 0
      %677 = vmatprep.subr.bf16.mxu0 0
      %678 = vmatpush1.bf16.msra.mxu0 0
      %679 = vmatprep.subr.bf16.mxu0 0
      %680 = vmatpush1.bf16.msra.mxu0 0
      %681 = vmatprep.subr.bf16.mxu0 0
      %682 = vmatpush1.bf16.msra.mxu0 0
      %683 = vmatprep.subr.bf16.mxu0 0
      %684 = vmatpush1.bf16.msra.mxu0 0
      %685 = vmatprep.mubr.bf16.mxu0 0
      %686 = vmatmul.mubr.bf16.gmra.mrb[0].mxu0 %v651
      %v687 = vpop.f32.mrb[0].mxu0
      %v688 = vadd.f32 %v255, %v687
      %v689 = vpop.f32.mrb[0].mxu0
      %v690 = vpop.f32.mrb[0].mxu0
      %v691 = vadd.f32 %v255, %v690
      %v692 = vpop.f32.mrb[0].mxu0
      %693 = vdwg.mxu0
      %v694 = vmul.f32 %v688, %v688
      %v695 = vmul.f32 %v691, %v691
      %v696 = vmul.f32 %v694, 0.035677407
      %v697 = vmul.f32 %v695, 0.035677407
      %v698 = vadd.f32 %v696, 0.7978846
      %v699 = vadd.f32 %v697, 0.7978846
      %v700 = vmul.f32 %v688, %v698
      %v701 = vmul.f32 %v691, %v699
      %v702 = vtanh.pop %v700
      %v703 = vtanh.pop %v701
      %v704 = vmul.f32 %v688, 0.5
      %v705 = vmul.f32 %v691, 0.5
      %v706 = vmul.f32 %v704, %v702
      %v707 = vmul.f32 %v705, %v703
      %v708 = vadd.f32 %v704, %v706
      %v709 = vadd.f32 %v705, %v707
      %v710 = vpack.c.bf16 %v709, %v708
      %v711 = vld [vmem:[%s3 + $0x80] sm:$0xf]
      %v712 = vld [vmem:[%s3 + $0x84] sm:$0xf]
      %v713 = vld [vmem:[%s3 + $0x88] sm:$0xf]
      %v714 = vld [vmem:[%s3 + $0x8c] sm:$0xf]
      %v715 = vld [vmem:[%s3 + $0x90] sm:$0xf]
      %v716 = vld [vmem:[%s3 + $0x94] sm:$0xf]
      %v717 = vld [vmem:[%s3 + $0x98] sm:$0xf]
      %v718 = vld [vmem:[%s3 + $0x9c] sm:$0xf]
      %v719 = vld [vmem:[%s3 + $0xa0] sm:$0xf]
      %v720 = vld [vmem:[%s3 + $0xa4] sm:$0xf]
      %v721 = vld [vmem:[%s3 + $0xa8] sm:$0xf]
      %v722 = vld [vmem:[%s3 + $0xac] sm:$0xf]
      %v723 = vld [vmem:[%s3 + $0xb0] sm:$0xf]
      %v724 = vld [vmem:[%s3 + $0xb4] sm:$0xf]
      %v725 = vld [vmem:[%s3 + $0xb8] sm:$0xf]
      %v726 = vld [vmem:[%s3 + $0xbc] sm:$0xf]
      %v743 = vunpack.c.l.b16 %v711
      %v744 = vunpack.c.l.b16 %v712
      %v745 = vunpack.c.l.b16 %v713
      %v746 = vunpack.c.l.b16 %v714
      %v747 = vunpack.c.l.b16 %v715
      %v748 = vunpack.c.l.b16 %v716
      %v749 = vunpack.c.l.b16 %v717
      %v750 = vunpack.c.l.b16 %v718
      %v751 = vunpack.c.l.b16 %v719
      %v752 = vunpack.c.l.b16 %v720
      %v753 = vunpack.c.l.b16 %v721
      %v754 = vunpack.c.l.b16 %v722
      %v755 = vunpack.c.l.b16 %v723
      %v756 = vunpack.c.l.b16 %v724
      %v757 = vunpack.c.l.b16 %v725
      %v758 = vunpack.c.l.b16 %v726
      %v759 = vpack.c.b16 %v744, %v743
      %v760 = vpack.c.b16 %v746, %v745
      %v761 = vpack.c.b16 %v748, %v747
      %v762 = vpack.c.b16 %v750, %v749
      %v763 = vpack.c.b16 %v752, %v751
      %v764 = vpack.c.b16 %v754, %v753
      %v765 = vpack.c.b16 %v756, %v755
      %v766 = vpack.c.b16 %v758, %v757
      %775 = vmatprep.subr.bf16.mxu0 0
      %776 = vmatpush1.bf16.msra.mxu0 %v759
      %777 = vmatprep.subr.bf16.mxu0 0
      %778 = vmatpush1.bf16.msra.mxu0 %v760
      %779 = vmatprep.subr.bf16.mxu0 0
      %780 = vmatpush1.bf16.msra.mxu0 %v761
      %781 = vmatprep.subr.bf16.mxu0 0
      %782 = vmatpush1.bf16.msra.mxu0 %v762
      %783 = vmatprep.subr.bf16.mxu0 0
      %784 = vmatpush1.bf16.msra.mxu0 %v763
      %785 = vmatprep.subr.bf16.mxu0 0
      %786 = vmatpush1.bf16.msra.mxu0 %v764
      %787 = vmatprep.subr.bf16.mxu0 0
      %788 = vmatpush1.bf16.msra.mxu0 %v765
      %789 = vmatprep.subr.bf16.mxu0 0
      %790 = vmatpush1.bf16.msra.mxu0 %v766
      %791 = vmatprep.subr.bf16.mxu0 0
      %792 = vmatpush1.bf16.msra.mxu0 0
      %793 = vmatprep.subr.bf16.mxu0 0
      %794 = vmatpush1.bf16.msra.mxu0 0
      %795 = vmatprep.subr.bf16.mxu0 0
      %796 = vmatpush1.bf16.msra.mxu0 0
      %797 = vmatprep.subr.bf16.mxu0 0
      %798 = vmatpush1.bf16.msra.mxu0 0
      %799 = vmatprep.subr.bf16.mxu0 0
      %800 = vmatpush1.bf16.msra.mxu0 0
      %801 = vmatprep.subr.bf16.mxu0 0
      %802 = vmatpush1.bf16.msra.mxu0 0
      %803 = vmatprep.subr.bf16.mxu0 0
      %804 = vmatpush1.bf16.msra.mxu0 0
      %805 = vmatprep.subr.bf16.mxu0 0
      %806 = vmatpush1.bf16.msra.mxu0 0
      %807 = vmatprep.mubr.bf16.mxu0 0
      %808 = vmatmul.mubr.bf16.gmra.mrb[0].mxu0 %v710
      %v809 = vpop.f32.mrb[0].mxu0
      %v810 = vadd.f32 0.0, %v809
      %v811 = vpop.f32.mrb[0].mxu0
      %v812 = vpop.f32.mrb[0].mxu0
      %v813 = vadd.f32 0.0, %v812
      %v814 = vpop.f32.mrb[0].mxu0
      %815 = vdwg.mxu0
      %v816 = vadd.f32 %v639, %v810
      %v817 = vadd.f32 %v642, %v813
      %v818 = vld [vmem:[%s223 + $0xc] sm:$0xf]
      %v819 = vld [vmem:[%s223 + $0x1c] sm:$0xf]
      %v822 = vunpack.c.l.b16 %v818
      %v823 = vunpack.c.l.b16 %v819
      %v824 = vpack.c.b16 %v823, %v822
      %826 = vmatprep.subr.bf16.mxu0 0
      %827 = vmatpush1.bf16.msra.mxu0 %v295
      %828 = vmatprep.subr.bf16.mxu0 0
      %829 = vmatpush1.bf16.msra.mxu0 %v296
      %830 = vmatprep.subr.bf16.mxu0 0
      %831 = vmatpush1.bf16.msra.mxu0 %v297
      %832 = vmatprep.subr.bf16.mxu0 0
      %833 = vmatpush1.bf16.msra.mxu0 %v298
      %834 = vmatprep.subr.bf16.mxu0 0
      %835 = vmatpush1.bf16.msra.mxu0 %v299
      %836 = vmatprep.subr.bf16.mxu0 0
      %837 = vmatpush1.bf16.msra.mxu0 %v300
      %838 = vmatprep.subr.bf16.mxu0 0
      %839 = vmatpush1.bf16.msra.mxu0 %v301
      %840 = vmatprep.subr.bf16.mxu0 0
      %841 = vmatpush1.bf16.msra.mxu0 %v302
      %842 = vmatprep.subr.bf16.mxu0 0
      %843 = vmatpush1.bf16.msra.mxu0 0
      %844 = vmatprep.subr.bf16.mxu0 0
      %845 = vmatpush1.bf16.msra.mxu0 0
      %846 = vmatprep.subr.bf16.mxu0 0
      %847 = vmatpush1.bf16.msra.mxu0 0
      %848 = vmatprep.subr.bf16.mxu0 0
      %849 = vmatpush1.bf16.msra.mxu0 0
      %850 = vmatprep.subr.bf16.mxu0 0
      %851 = vmatpush1.bf16.msra.mxu0 0
      %852 = vmatprep.subr.bf16.mxu0 0
      %853 = vmatpush1.bf16.msra.mxu0 0
      %854 = vmatprep.subr.bf16.mxu0 0
      %855 = vmatpush1.bf16.msra.mxu0 0
      %856 = vmatprep.subr.bf16.mxu0 0
      %857 = vmatpush1.bf16.msra.mxu0 0
      %858 = vmatprep.mubr.bf16.mxu0 0
      %859 = vmatmul.mubr.bf16.gmra.mrb[0].mxu0 %v824
      %v860 = vpop.f32.mrb[0].mxu0
      %v861 = vadd.f32 %v255, %v860
      %v862 = vpop.f32.mrb[0].mxu0
      %v863 = vpop.f32.mrb[0].mxu0
      %v864 = vadd.f32 %v255, %v863
      %v865 = vpop.f32.mrb[0].mxu0
      %866 = vdwg.mxu0
      %v867 = vmul.f32 %v861, %v861
      %v868 = vmul.f32 %v864, %v864
      %v869 = vmul.f32 %v867, 0.035677407
      %v870 = vmul.f32 %v868, 0.035677407
      %v871 = vadd.f32 %v869, 0.7978846
      %v872 = vadd.f32 %v870, 0.7978846
      %v873 = vmul.f32 %v861, %v871
      %v874 = vmul.f32 %v864, %v872
      %v875 = vtanh.pop %v873
      %v876 = vtanh.pop %v874
      %v877 = vmul.f32 %v861, 0.5
      %v878 = vmul.f32 %v864, 0.5
      %v879 = vmul.f32 %v877, %v875
      %v880 = vmul.f32 %v878, %v876
      %v881 = vadd.f32 %v877, %v879
      %v882 = vadd.f32 %v878, %v880
      %v883 = vpack.c.bf16 %v882, %v881
      %v884 = vld [vmem:[%s3 + $0xc0] sm:$0xf]
      %v885 = vld [vmem:[%s3 + $0xc4] sm:$0xf]
      %v886 = vld [vmem:[%s3 + $0xc8] sm:$0xf]
      %v887 = vld [vmem:[%s3 + $0xcc] sm:$0xf]
      %v888 = vld [vmem:[%s3 + $0xd0] sm:$0xf]
      %v889 = vld [vmem:[%s3 + $0xd4] sm:$0xf]
      %v890 = vld [vmem:[%s3 + $0xd8] sm:$0xf]
      %v891 = vld [vmem:[%s3 + $0xdc] sm:$0xf]
      %v892 = vld [vmem:[%s3 + $0xe0] sm:$0xf]
      %v893 = vld [vmem:[%s3 + $0xe4] sm:$0xf]
      %v894 = vld [vmem:[%s3 + $0xe8] sm:$0xf]
      %v895 = vld [vmem:[%s3 + $0xec] sm:$0xf]
      %v896 = vld [vmem:[%s3 + $0xf0] sm:$0xf]
      %v897 = vld [vmem:[%s3 + $0xf4] sm:$0xf]
      %v898 = vld [vmem:[%s3 + $0xf8] sm:$0xf]
      %v899 = vld [vmem:[%s3 + $0xfc] sm:$0xf]
      %v916 = vunpack.c.l.b16 %v884
      %v917 = vunpack.c.l.b16 %v885
      %v918 = vunpack.c.l.b16 %v886
      %v919 = vunpack.c.l.b16 %v887
      %v920 = vunpack.c.l.b16 %v888
      %v921 = vunpack.c.l.b16 %v889
      %v922 = vunpack.c.l.b16 %v890
      %v923 = vunpack.c.l.b16 %v891
      %v924 = vunpack.c.l.b16 %v892
      %v925 = vunpack.c.l.b16 %v893
      %v926 = vunpack.c.l.b16 %v894
      %v927 = vunpack.c.l.b16 %v895
      %v928 = vunpack.c.l.b16 %v896
      %v929 = vunpack.c.l.b16 %v897
      %v930 = vunpack.c.l.b16 %v898
      %v931 = vunpack.c.l.b16 %v899
      %v932 = vpack.c.b16 %v917, %v916
      %v933 = vpack.c.b16 %v919, %v918
      %v934 = vpack.c.b16 %v921, %v920
      %v935 = vpack.c.b16 %v923, %v922
      %v936 = vpack.c.b16 %v925, %v924
      %v937 = vpack.c.b16 %v927, %v926
      %v938 = vpack.c.b16 %v929, %v928
      %v939 = vpack.c.b16 %v931, %v930
      %948 = vmatprep.subr.bf16.mxu0 0
      %949 = vmatpush1.bf16.msra.mxu0 %v932
      %950 = vmatprep.subr.bf16.mxu0 0
      %951 = vmatpush1.bf16.msra.mxu0 %v933
      %952 = vmatprep.subr.bf16.mxu0 0
      %953 = vmatpush1.bf16.msra.mxu0 %v934
      %954 = vmatprep.subr.bf16.mxu0 0
      %955 = vmatpush1.bf16.msra.mxu0 %v935
      %956 = vmatprep.subr.bf16.mxu0 0
      %957 = vmatpush1.bf16.msra.mxu0 %v936
      %958 = vmatprep.subr.bf16.mxu0 0
      %959 = vmatpush1.bf16.msra.mxu0 %v937
      %960 = vmatprep.subr.bf16.mxu0 0
      %961 = vmatpush1.bf16.msra.mxu0 %v938
      %962 = vmatprep.subr.bf16.mxu0 0
      %963 = vmatpush1.bf16.msra.mxu0 %v939
      %964 = vmatprep.subr.bf16.mxu0 0
      %965 = vmatpush1.bf16.msra.mxu0 0
      %966 = vmatprep.subr.bf16.mxu0 0
      %967 = vmatpush1.bf16.msra.mxu0 0
      %968 = vmatprep.subr.bf16.mxu0 0
      %969 = vmatpush1.bf16.msra.mxu0 0
      %970 = vmatprep.subr.bf16.mxu0 0
      %971 = vmatpush1.bf16.msra.mxu0 0
      %972 = vmatprep.subr.bf16.mxu0 0
      %973 = vmatpush1.bf16.msra.mxu0 0
      %974 = vmatprep.subr.bf16.mxu0 0
      %975 = vmatpush1.bf16.msra.mxu0 0
      %976 = vmatprep.subr.bf16.mxu0 0
      %977 = vmatpush1.bf16.msra.mxu0 0
      %978 = vmatprep.subr.bf16.mxu0 0
      %979 = vmatpush1.bf16.msra.mxu0 0
      %980 = vmatprep.mubr.bf16.mxu0 0
      %981 = vmatmul.mubr.bf16.gmra.mrb[0].mxu0 %v883
      %v982 = vpop.f32.mrb[0].mxu0
      %v983 = vadd.f32 0.0, %v982
      %v984 = vpop.f32.mrb[0].mxu0
      %v985 = vpop.f32.mrb[0].mxu0
      %v986 = vadd.f32 0.0, %v985
      %v987 = vpop.f32.mrb[0].mxu0
      %988 = vdwg.mxu0
      %v989 = vadd.f32 %v816, %v983
      %v990 = vadd.f32 %v817, %v986
      %v991 = vld [vmem:[%s4] sm:$0x1]
      %v993 = vlaneseq
      %v994 = vshrl.u32 %v993, 7
      %v995 = vsub.s32 0, %v994
      %v996 = vrot.slane %v991, %v995
      %v998 = vadd.f32 %v989, %v996
      %v999 = vadd.f32 %v990, %v996
      %v1000 = vmul.f32 %v998, %v998
      %v1001 = vmul.f32 %v999, %v999
      %v1002 = vmul.f32 %v1000, 0.035677407
      %v1003 = vmul.f32 %v1001, 0.035677407
      %v1004 = vadd.f32 %v1002, 0.7978846
      %v1005 = vadd.f32 %v1003, 0.7978846
      %v1006 = vmul.f32 %v998, %v1004
      %v1007 = vmul.f32 %v999, %v1005
      %v1008 = vtanh.pop %v1006
      %v1009 = vtanh.pop %v1007
      %v1010 = vmul.f32 %v998, 0.5
      %v1011 = vmul.f32 %v999, 0.5
      %v1012 = vmul.f32 %v1010, %v1008
      %v1013 = vmul.f32 %v1011, %v1009
      %v1014 = vadd.f32 %v1010, %v1012
      %v1015 = vadd.f32 %v1011, %v1013
      %v1016 = vpack.c.bf16 %v1015, %v1014
      %v1018 = vunpack.c.l.b16 %v1016
      %v1019 = vunpack.c.h.b16 %v1016
      %v1020 = vpack.c.b16 %v1018, %v1018
      %v1021 = vpack.c.b16 %v1019, %v1019
      %1024 = vst [vmem:[%s229] sm:$0xf] %v1020
      %1025 = vst [vmem:[%s229 + $0x4] sm:$0xf] %v1021
      %s1026 = smul.u32 2, %s16
      %p1027 = scmp.lt.s32.totalorder %s1026, 3
      %s1028 = scalar_select %p1027, %s1026, 3
      %s1029 = smul.addr %s1028, 4
      %s1030 = scalar_lea.vmem %s5, %s1029
      // Predicated region
      $region41: #{predictor_forward.1} parent=39 // pred_check
        %p1031 = pneg %p144
      $region42: #{predictor_forward.1} parent=39 // pred_check_branch
        %1033 = sbr.rel (%p1031) target = $region44
      $region43: #{predictor_forward.1} parent=39 // pred_region
        %s1034 = smul.u32 2, %s16
      $region44: #{predictor_forward.1} parent=39 // pred_fallthru
        _
    $region40: #{predictor_forward.1} parent=5 // pred_fallthru
      _
    %p1035 = scmp.le.s32.totalorder 2, %s11
    // Predicated region
    $region45: #{predictor_forward.1} parent=5 // pred_check
      %p1036 = pneg %p1035
    $region46: #{predictor_forward.1} parent=5 // pred_check_branch
      %1038 = sbr.rel (%p1036) target = $region48
    $region47: #{predictor_forward.1} parent=5 // pred_region
      %s1039 = ssub.s32 %s11, 2
      // Predicated region
      $region49: #{predictor_forward.1} parent=47 // pred_check
        %p1040 = pneg %p150
      $region50: #{predictor_forward.1} parent=47 // pred_check_branch
        %1042 = sbr.rel (%p1040) target = $region52
      $region51: #{predictor_forward.1} parent=47 // pred_region
        %s1043 = smul.u32 2, %s17
        %p1044 = scmp.lt.s32.totalorder %s1043, 3
        %s1045 = scalar_select %p1044, %s1043, 3
        %s1046 = smul.addr %s1045, 4
        %s1047 = scalar_lea.vmem %s5, %s1046
      $region52: #{predictor_forward.1} parent=47 // pred_fallthru
        _
    $region48: #{predictor_forward.1} parent=5 // pred_fallthru
      _
  $region6: #{predictor_forward.1} parent=0 // loop_footer
    %s15 = sadd.s32 1, %s11
  $region7: #{predictor_forward.1} parent=0 // loop_footer_branch
    %10 = sbr.rel target = $region3
  $region8: #{predictor_forward.1} parent=0 // loop_exit
    _

</llo_original>
